<compile_context>
chip_gen: v7x
topology: tpu7x:2x2x1
jax: 0.10.0
libtpu: 0.0.40
codegen_flags: <defaults>
</compile_context>

<pallas_src>
import jax
import jax.numpy as jnp
from jax.experimental import pallas as pl
from jax.experimental.pallas import tpu as pltpu


def _alias_noop_kernel(x_ref, o_ref):
    # Output aliases the input at the XLA buffer level, so the destination
    # already holds the bytes.  Intentionally empty: no DMA, no vld/vst.
    del x_ref, o_ref


def _dma_copy_kernel(x_hbm, o_hbm, sem):
    # One descriptor, direct HBM->HBM: full-bandwidth memcpy with no VMEM
    # staging and no grid / per-step overhead.
    copy = pltpu.make_async_copy(x_hbm, o_hbm, sem)
    copy.start()
    copy.wait()


def identity(x: jax.Array, *, copy: bool = False) -> jax.Array:
    """Pallas implementation of Identity.forward(x) == x.

    copy=False (default): the output aliases the input buffer and the kernel
    moves no data.  Donate x under jax.jit for a true in-place no-op;
    otherwise XLA inserts one defensive copy of x before the aliased call.

    copy=True: materialize a distinct output buffer via one HBM->HBM DMA.
    """
    if x.size == 0:
        return x

    out_shape = jax.ShapeDtypeStruct(x.shape, x.dtype)
    hbm_spec = pl.BlockSpec(memory_space=pl.ANY)  # leave data in HBM, no auto-DMA

    if not copy:
        return pl.pallas_call(
            _alias_noop_kernel,
            out_shape=out_shape,
            in_specs=[hbm_spec],
            out_specs=hbm_spec,
            # Output aliases the input buffer: zero extra HBM allocation and
            # zero bytes of HBM<->VMEM traffic inside the kernel.
            input_output_aliases={0: 0},
            cost_estimate=pl.CostEstimate(
                flops=0, transcendentals=0, bytes_accessed=0),
        )(x)

    itemsize = jnp.dtype(x.dtype).itemsize
    return pl.pallas_call(
        _dma_copy_kernel,
        out_shape=out_shape,
        in_specs=[hbm_spec],
        out_specs=hbm_spec,
        scratch_shapes=[pltpu.SemaphoreType.DMA],
        cost_estimate=pl.CostEstimate(
            flops=0, transcendentals=0,
            bytes_accessed=2 * x.size * itemsize),
    )(x)


if __name__ == "__main__":
    key = jax.random.PRNGKey(0)
    x = jax.random.normal(key, (2, 4, 16, 16), dtype=jnp.float32)

    # Default aliased / zero-data-movement path.
    y = identity(x)
    jax.block_until_ready(y)
    assert y.shape == x.shape and y.dtype == x.dtype
    assert bool(jnp.array_equal(y, x))

    # Explicit-copy path (single HBM->HBM DMA into a fresh buffer).
    y2 = identity(x, copy=True)
    jax.block_until_ready(y2)
    assert y2.shape == x.shape and y2.dtype == x.dtype
    assert bool(jnp.array_equal(y2, x))

    print("KERNEL_OK")
</pallas_src>

<mosaic_0001>
module attributes {stable_mosaic.version = 11 : i64} {
  func.func @_alias_noop_kernel(%arg0: memref<2x4x16x16xf32, #tpu.memory_space<any>>, %arg1: memref<2x4x16x16xf32, #tpu.memory_space<any>>) attributes {dimension_semantics = [], scalar_prefetch = 0 : i64, scratch_operands = 0 : i64, tpu.core_type = #tpu.core_type<tc>} {
    return
  }
}

</mosaic_0001>

<llo_original>
// kernel: tpu_custom_call.1
$region0: #{tpu_custom_call.1}
  #allocation0 [shape = 'u32[]', space=smem, size = 0x4, offset = 0x4, fixed_abs, tag = 'smem constant byte address 0x4 - core index']
  #allocation1 [shape = 'u32[144,128]{1,0:T(1,128)}', space=vmem, size = 0x12000, scoped, tag = 'internal scratch']
  %s0 = inlined_call_operand.hbm [shape: f32[2,4,16,16], index: 0, kind: input, shape index: {}, may-alias: {0,1}]
  %s1 = inlined_call_operand.hbm [shape: f32[2,4,16,16], index: 1, kind: output, shape index: {}, may-alias: {0,1}]
  %s2 = sld [smem:[#allocation0]]
  $region2: #{tpu_custom_call.1} parent=0
    _
  %s4 = ssub.s32 1, %s2
  %s5 = scalar_select 0, %s4, %s2

</llo_original>
